<compile_context>
chip_gen: v5e
topology: v5e:2x2
jax: 0.10.0
libtpu: 0.0.40
codegen_flags: <defaults>
</compile_context>

<pallas_src>
import jax
import jax.numpy as jnp
from jax.experimental import pallas as pl
from jax.experimental.pallas import tpu as pltpu


def groupwise_linear_kernel(x_ref, w_ref, b_ref, out_ref):
    # x_ref: [block_b, C, H]   w_ref: [C, H]   b_ref: [1, C]   out_ref: [block_b, C]
    x = x_ref[...].astype(jnp.float32)
    w = w_ref[...].astype(jnp.float32)
    # One broadcast of W (fused into the multiply), VPU multiply, XLU lane reduce.
    out = jnp.sum(x * w[None, :, :], axis=-1)          # [block_b, C]
    out = out + b_ref[...].astype(jnp.float32)          # bias broadcast over batch tile
    out_ref[...] = out.astype(out_ref.dtype)


def _pick_block_b(B, C, H, itemsize, vmem_budget_bytes=8 * 1024 * 1024):
    """Largest batch tile that (a) divides B, (b) is a multiple of 8 when tiled,
    and (c) keeps the double-buffered x tile under the VMEM budget."""
    tile_bytes = lambda bb: 2 * bb * C * H * itemsize  # double-buffered input tile
    if tile_bytes(B) <= vmem_budget_bytes:
        return B                                        # single tile, no ragged concerns
    best = None
    bb = 8
    while bb <= B:
        if B % bb == 0 and tile_bytes(bb) <= vmem_budget_bytes:
            best = bb
        bb += 8
    return best if best is not None else B              # fallback: whole batch


def groupwise_linear(x, W, b=None, *, block_b=None):
    """Pallas forward for GroupWiseLinear.

    x: [B, C, H]
    W: [C, H]        (the torch parameter W[0])
    b: [1, C] or None (the torch parameter b)
    returns: [B, C] with x.dtype
    """
    B, C, H = x.shape
    assert W.shape == (C, H)
    if b is None:
        b = jnp.zeros((1, C), dtype=x.dtype)
    if block_b is None:
        block_b = _pick_block_b(B, C, H, jnp.dtype(x.dtype).itemsize)
    assert B % block_b == 0, "batch must be divisible by the batch tile"
    # (8,128) rule: every block's trailing dims equal the full array dims
    # (C, H) / (1, C) / (C); the out block's second-to-last dim (block_b) is
    # either full B or a multiple of 8.
    assert block_b == B or block_b % 8 == 0

    grid = (pl.cdiv(B, block_b),)
    return pl.pallas_call(
        groupwise_linear_kernel,
        out_shape=jax.ShapeDtypeStruct((B, C), x.dtype),
        grid_spec=pltpu.PrefetchScalarGridSpec(
            num_scalar_prefetch=0,
            grid=grid,
            in_specs=[
                pl.BlockSpec((block_b, C, H), lambda i: (i, 0, 0)),  # x batch tile
                pl.BlockSpec((C, H), lambda i: (0, 0)),              # W (resident)
                pl.BlockSpec((1, C), lambda i: (0, 0)),              # bias (resident)
            ],
            out_specs=pl.BlockSpec((block_b, C), lambda i: (i, 0)),  # lane-dense [*, C]
        ),
        compiler_params=pltpu.CompilerParams(
            dimension_semantics=("parallel",),   # batch tiles are independent
        ),
    )(x, W, b)


def groupwise_linear_ref(x, W, b=None):
    """Pure-JAX reference mirroring the torch forward (f32 accumulation)."""
    out = (W[None, :, :].astype(jnp.float32) * x.astype(jnp.float32)).sum(-1)
    if b is not None:
        out = out + b.astype(jnp.float32)
    return out.astype(x.dtype)


if __name__ == "__main__":
    key = jax.random.PRNGKey(0)

    # Small shapes consistent with the module: batch=16, num_class=16, hidden_dim=32.
    B, NUM_CLASS, HIDDEN = 16, 16, 32

    k_x, k_w, k_b = jax.random.split(key, 3)
    x = jax.random.normal(k_x, (B, NUM_CLASS, HIDDEN), jnp.float32)

    # Parameter init matching reset_parameters(): uniform(-stdv, stdv), stdv = 1/sqrt(H).
    stdv = 1.0 / float(HIDDEN) ** 0.5
    W = jax.random.uniform(k_w, (NUM_CLASS, HIDDEN), jnp.float32,
                           minval=-stdv, maxval=stdv)
    b = jax.random.uniform(k_b, (1, NUM_CLASS), jnp.float32,
                           minval=-stdv, maxval=stdv)

    out = groupwise_linear(x, W, b)
    out = jax.block_until_ready(out)

    ref = groupwise_linear_ref(x, W, b)
    assert out.shape == (B, NUM_CLASS)
    assert jnp.allclose(out, ref, rtol=1e-5, atol=1e-5), (
        f"max abs err = {jnp.max(jnp.abs(out - ref))}")

    print("KERNEL_OK")
</pallas_src>

<mosaic_0001>
module attributes {stable_mosaic.version = 11 : i64} {
  func.func @groupwise_linear_kernel(%arg0: i32, %arg1: memref<16x16x32xf32, #tpu.memory_space<vmem>>, %arg2: memref<16x32xf32, #tpu.memory_space<vmem>>, %arg3: memref<1x16xf32, #tpu.memory_space<vmem>>, %arg4: memref<16x16xf32, #tpu.memory_space<vmem>>) attributes {dimension_semantics = [#tpu.dimension_semantics<parallel>], iteration_bounds = array<i64: 1>, scalar_prefetch = 0 : i64, scratch_operands = 0 : i64, tpu.core_type = #tpu.core_type<tc>, window_params = [{transform_indices = @transform_0, window_bounds = array<i64: 16, 16, 32>}, {pipeline_mode = #tpu.pipeline_mode<synchronous>, transform_indices = @transform_1, window_bounds = array<i64: 16, 32>}, {pipeline_mode = #tpu.pipeline_mode<synchronous>, transform_indices = @transform_2, window_bounds = array<i64: 1, 16>}, {transform_indices = @transform_3, window_bounds = array<i64: 16, 16>}]} {
    %c0 = arith.constant 0 : index
    %c0_0 = arith.constant 0 : index
    %c0_1 = arith.constant 0 : index
    %0 = vector.load %arg1[%c0, %c0_0, %c0_1] : memref<16x16x32xf32, #tpu.memory_space<vmem>>, vector<16x16x32xf32>
    %c0_2 = arith.constant 0 : index
    %c0_3 = arith.constant 0 : index
    %1 = vector.load %arg2[%c0_2, %c0_3] : memref<16x32xf32, #tpu.memory_space<vmem>>, vector<16x32xf32>
    %2 = vector.shape_cast %1 : vector<16x32xf32> to vector<1x16x32xf32>
    %3 = vector.broadcast %2 : vector<1x16x32xf32> to vector<16x16x32xf32>
    %4 = arith.mulf %0, %3 : vector<16x16x32xf32>
    %cst = arith.constant dense<0.000000e+00> : vector<16x16xf32>
    %5 = vector.multi_reduction <add>, %4, %cst [2] : vector<16x16x32xf32> to vector<16x16xf32>
    %c0_4 = arith.constant 0 : index
    %c0_5 = arith.constant 0 : index
    %6 = vector.load %arg3[%c0_4, %c0_5] : memref<1x16xf32, #tpu.memory_space<vmem>>, vector<1x16xf32>
    %7 = vector.broadcast %6 : vector<1x16xf32> to vector<16x16xf32>
    %8 = arith.addf %5, %7 : vector<16x16xf32>
    %c0_6 = arith.constant 0 : index
    %c0_7 = arith.constant 0 : index
    %9 = vector.load %arg4[%c0_6, %c0_7] : memref<16x16xf32, #tpu.memory_space<vmem>>, vector<16x16xf32>
    tpu.vector_store %arg4[%c0_6, %c0_7], %8 {strides = array<i32>} : memref<16x16xf32, #tpu.memory_space<vmem>>, vector<16x16xf32>,
    return
  }
  func.func @transform_0(%arg0: i32) -> (i32, i32, i32) {
    %c0_i32 = arith.constant 0 : i32
    %c0_i32_0 = arith.constant 0 : i32
    %c0_i32_1 = arith.constant 0 : i32
    return %arg0, %c0_i32, %c0_i32_0 : i32, i32, i32
  }
  func.func @transform_1(%arg0: i32) -> (i32, i32) {
    %c0_i32 = arith.constant 0 : i32
    %c0_i32_0 = arith.constant 0 : i32
    %c0_i32_1 = arith.constant 0 : i32
    return %c0_i32, %c0_i32_0 : i32, i32
  }
  func.func @transform_2(%arg0: i32) -> (i32, i32) {
    %c0_i32 = arith.constant 0 : i32
    %c0_i32_0 = arith.constant 0 : i32
    %c0_i32_1 = arith.constant 0 : i32
    return %c0_i32, %c0_i32_0 : i32, i32
  }
  func.func @transform_3(%arg0: i32) -> (i32, i32) {
    %c0_i32 = arith.constant 0 : i32
    %c0_i32_0 = arith.constant 0 : i32
    return %arg0, %c0_i32 : i32, i32
  }
}

</mosaic_0001>

<llo_original>
// kernel: tpu_custom_call.1
$region0: #{tpu_custom_call.1}
  #allocation0 [shape = 'u32[]', space=smem, size = 0x4, offset = 0x4, fixed_abs, tag = 'smem constant byte address 0x4 - core index']
  #allocation1 [shape = 'u32[72,128]{1,0:T(1,128)}', space=vmem, size = 0x9000, scoped, tag = 'internal scratch']
  %s0 = inlined_call_operand.hbm [shape: f32[16,16,32], index: 0, kind: input, shape index: {}]
  %s1 = inlined_call_operand.hbm [shape: f32[16,32], index: 1, kind: input, shape index: {}]
  %s2 = inlined_call_operand.vmem [shape: f32[1,16], index: 2, kind: input, shape index: {}]
  %s3 = inlined_call_operand.hbm [shape: f32[16,16], index: 3, kind: output, shape index: {}]
  %s4 = sld [smem:[#allocation0]]
  $region30: #{tpu_custom_call.1} parent=0
    _
  %s6 = ssub.s32 1, %s4
  %s7 = scalar_select 0, %s6, %s4
  $region1: #{tpu_custom_call.1} parent=0
    #allocation2 [shape = 'u8[131072]{0}', space=vmem, size = 0x20000, scoped, tag = 'input window, operand 0, single buffered']
    #allocation3 [shape = 's32[1]{0}', space=sflag, size = 0x4, scoped, tag = 'scoped memory for tpu_custom_call.1']
    #allocation4 [shape = 's32[1]{0}', space=sflag, size = 0x4, scoped, tag = 'scoped memory for tpu_custom_call.1']
    #allocation5 [shape = 'u8[8192]{0}', space=vmem, size = 0x2000, scoped, tag = 'input window, operand 1, single buffered']
    #allocation6 [shape = 's32[1]{0}', space=sflag, size = 0x4, scoped, tag = 'scoped memory for tpu_custom_call.1']
    #allocation7 [shape = 'u8[8192]{0}', space=vmem, size = 0x2000, scoped, tag = 'output window, operand 0, single buffered']
    %8 = vsyncpa [#allocation3], 0
    %9 = vsyncpa [#allocation6], 0
    %10 = vsyncpa [#allocation4], 0
    // Predicated region
    $region2: #{tpu_custom_call.1} parent=1 // pred_check
      _
    $region3: #{tpu_custom_call.1} parent=1 // pred_check_branch
      %12 = sbr.rel (0) target = $region5
    $region4: #{tpu_custom_call.1} parent=1 // pred_region
      %14 = vsyncadd [#allocation3], 0
      %s15 = sshll.u32 %s0, 4
      %s16 = int_to_ptr.hbm [resolvable:$true] %s15
      %s17 = sshll.u32 [#allocation2], 4
      %s18 = int_to_ptr.vmem [resolvable:$true] %s17
      %23 = dma.hbm_to_vmem [thread:$0]  %s16, 4096, %s18, [#allocation3], 128, 128, 8
    $region5: #{tpu_custom_call.1} parent=1 // pred_fallthru
      _
    // Predicated region
    $region6: #{tpu_custom_call.1} parent=1 // pred_check
      _
    $region7: #{tpu_custom_call.1} parent=1 // pred_check_branch
      %25 = sbr.rel (0) target = $region9
    $region8: #{tpu_custom_call.1} parent=1 // pred_region
      %27 = vsyncadd [#allocation6], 0
      %s28 = sshll.u32 %s1, 4
      %s29 = int_to_ptr.hbm [resolvable:$true] %s28
      %s30 = sshll.u32 [#allocation5], 4
      %s31 = int_to_ptr.vmem [resolvable:$true] %s30
      %36 = dma.hbm_to_vmem [thread:$0]  %s29, 256, %s31, [#allocation6], 128, 128, 8
    $region9: #{tpu_custom_call.1} parent=1 // pred_fallthru
      _
    // Predicated region
    $region10: #{tpu_custom_call.1} parent=1 // pred_check
      _
    $region11: #{tpu_custom_call.1} parent=1 // pred_check_branch
      %38 = sbr.rel (0) target = $region13
    $region12: #{tpu_custom_call.1} parent=1 // pred_region
      _
    $region13: #{tpu_custom_call.1} parent=1 // pred_fallthru
      _
    // Predicated region
    $region14: #{tpu_custom_call.1} parent=1 // pred_check
      _
    $region15: #{tpu_custom_call.1} parent=1 // pred_check_branch
      %40 = sbr.rel (0) target = $region17
    $region16: #{tpu_custom_call.1} parent=1 // pred_region
      %42 = dma.done [#allocation3], 4096
    $region17: #{tpu_custom_call.1} parent=1 // pred_fallthru
      _
    // Predicated region
    $region18: #{tpu_custom_call.1} parent=1 // pred_check
      _
    $region19: #{tpu_custom_call.1} parent=1 // pred_check_branch
      %44 = sbr.rel (0) target = $region21
    $region20: #{tpu_custom_call.1} parent=1 // pred_region
      %46 = dma.done [#allocation6], 256
    $region21: #{tpu_custom_call.1} parent=1 // pred_fallthru
      _
    %v47 = vld [vmem:[#allocation2] sm:$0xff]
    %v48 = vld [vmem:[#allocation2 + $0x8] sm:$0xff]
    %v49 = vld [vmem:[#allocation2 + $0x10] sm:$0xff]
    %v50 = vld [vmem:[#allocation2 + $0x18] sm:$0xff]
    %v51 = vld [vmem:[#allocation2 + $0x20] sm:$0xff]
    %v52 = vld [vmem:[#allocation2 + $0x28] sm:$0xff]
    %v53 = vld [vmem:[#allocation2 + $0x30] sm:$0xff]
    %v54 = vld [vmem:[#allocation2 + $0x38] sm:$0xff]
    %v55 = vld [vmem:[#allocation2 + $0x40] sm:$0xff]
    %v56 = vld [vmem:[#allocation2 + $0x48] sm:$0xff]
    %v57 = vld [vmem:[#allocation2 + $0x50] sm:$0xff]
    %v58 = vld [vmem:[#allocation2 + $0x58] sm:$0xff]
    %v59 = vld [vmem:[#allocation2 + $0x60] sm:$0xff]
    %v60 = vld [vmem:[#allocation2 + $0x68] sm:$0xff]
    %v61 = vld [vmem:[#allocation2 + $0x70] sm:$0xff]
    %v62 = vld [vmem:[#allocation2 + $0x78] sm:$0xff]
    %v63 = vld [vmem:[#allocation2 + $0x80] sm:$0xff]
    %v64 = vld [vmem:[#allocation2 + $0x88] sm:$0xff]
    %v65 = vld [vmem:[#allocation2 + $0x90] sm:$0xff]
    %v66 = vld [vmem:[#allocation2 + $0x98] sm:$0xff]
    %v67 = vld [vmem:[#allocation2 + $0xa0] sm:$0xff]
    %v68 = vld [vmem:[#allocation2 + $0xa8] sm:$0xff]
    %v69 = vld [vmem:[#allocation2 + $0xb0] sm:$0xff]
    %v70 = vld [vmem:[#allocation2 + $0xb8] sm:$0xff]
    %v71 = vld [vmem:[#allocation2 + $0xc0] sm:$0xff]
    %v72 = vld [vmem:[#allocation2 + $0xc8] sm:$0xff]
    %v73 = vld [vmem:[#allocation2 + $0xd0] sm:$0xff]
    %v74 = vld [vmem:[#allocation2 + $0xd8] sm:$0xff]
    %v75 = vld [vmem:[#allocation2 + $0xe0] sm:$0xff]
    %v76 = vld [vmem:[#allocation2 + $0xe8] sm:$0xff]
    %v77 = vld [vmem:[#allocation2 + $0xf0] sm:$0xff]
    %v78 = vld [vmem:[#allocation2 + $0xf8] sm:$0xff]
    %v79 = vld [vmem:[#allocation5] sm:$0xff]
    %v80 = vld [vmem:[#allocation5 + $0x8] sm:$0xff]
    %v81 = vmul.f32 %v47, %v79
    %v82 = vmul.f32 %v48, %v80
    %v83 = vmul.f32 %v49, %v79
    %v84 = vmul.f32 %v50, %v80
    %v85 = vmul.f32 %v51, %v79
    %v86 = vmul.f32 %v52, %v80
    %v87 = vmul.f32 %v53, %v79
    %v88 = vmul.f32 %v54, %v80
    %v89 = vmul.f32 %v55, %v79
    %v90 = vmul.f32 %v56, %v80
    %v91 = vmul.f32 %v57, %v79
    %v92 = vmul.f32 %v58, %v80
    %v93 = vmul.f32 %v59, %v79
    %v94 = vmul.f32 %v60, %v80
    %v95 = vmul.f32 %v61, %v79
    %v96 = vmul.f32 %v62, %v80
    %v97 = vmul.f32 %v63, %v79
    %v98 = vmul.f32 %v64, %v80
    %v99 = vmul.f32 %v65, %v79
    %v100 = vmul.f32 %v66, %v80
    %v101 = vmul.f32 %v67, %v79
    %v102 = vmul.f32 %v68, %v80
    %v103 = vmul.f32 %v69, %v79
    %v104 = vmul.f32 %v70, %v80
    %v105 = vmul.f32 %v71, %v79
    %v106 = vmul.f32 %v72, %v80
    %v107 = vmul.f32 %v73, %v79
    %v108 = vmul.f32 %v74, %v80
    %v109 = vmul.f32 %v75, %v79
    %v110 = vmul.f32 %v76, %v80
    %v111 = vmul.f32 %v77, %v79
    %v112 = vmul.f32 %v78, %v80
    %vm113 = vcmask 261120
    %v114 = vsel %vm113, %v81, 0.0
    %115 = vadd.xlane.f32.xlu0 %v114
    %v116 = vpop.xlane.xlu0 %115
    %v117 = vsel %vm113, %v82, 0.0
    %118 = vadd.xlane.f32.xlu0 %v117
    %v119 = vpop.xlane.xlu0 %118
    %v120 = vsel %vm113, %v83, 0.0
    %121 = vadd.xlane.f32.xlu0 %v120
    %v122 = vpop.xlane.xlu0 %121
    %v123 = vsel %vm113, %v84, 0.0
    %124 = vadd.xlane.f32.xlu0 %v123
    %v125 = vpop.xlane.xlu0 %124
    %v126 = vsel %vm113, %v85, 0.0
    %127 = vadd.xlane.f32.xlu0 %v126
    %v128 = vpop.xlane.xlu0 %127
    %v129 = vsel %vm113, %v86, 0.0
    %130 = vadd.xlane.f32.xlu0 %v129
    %v131 = vpop.xlane.xlu0 %130
    %v132 = vsel %vm113, %v87, 0.0
    %133 = vadd.xlane.f32.xlu0 %v132
    %v134 = vpop.xlane.xlu0 %133
    %v135 = vsel %vm113, %v88, 0.0
    %136 = vadd.xlane.f32.xlu0 %v135
    %v137 = vpop.xlane.xlu0 %136
    %v138 = vsel %vm113, %v89, 0.0
    %139 = vadd.xlane.f32.xlu0 %v138
    %v140 = vpop.xlane.xlu0 %139
    %v141 = vsel %vm113, %v90, 0.0
    %142 = vadd.xlane.f32.xlu0 %v141
    %v143 = vpop.xlane.xlu0 %142
    %v144 = vsel %vm113, %v91, 0.0
    %145 = vadd.xlane.f32.xlu0 %v144
    %v146 = vpop.xlane.xlu0 %145
    %v147 = vsel %vm113, %v92, 0.0
    %148 = vadd.xlane.f32.xlu0 %v147
    %v149 = vpop.xlane.xlu0 %148
    %v150 = vsel %vm113, %v93, 0.0
    %151 = vadd.xlane.f32.xlu0 %v150
    %v152 = vpop.xlane.xlu0 %151
    %v153 = vsel %vm113, %v94, 0.0
    %154 = vadd.xlane.f32.xlu0 %v153
    %v155 = vpop.xlane.xlu0 %154
    %v156 = vsel %vm113, %v95, 0.0
    %157 = vadd.xlane.f32.xlu0 %v156
    %v158 = vpop.xlane.xlu0 %157
    %v159 = vsel %vm113, %v96, 0.0
    %160 = vadd.xlane.f32.xlu0 %v159
    %v161 = vpop.xlane.xlu0 %160
    %v162 = vsel %vm113, %v97, 0.0
    %163 = vadd.xlane.f32.xlu0 %v162
    %v164 = vpop.xlane.xlu0 %163
    %v165 = vsel %vm113, %v98, 0.0
    %166 = vadd.xlane.f32.xlu0 %v165
    %v167 = vpop.xlane.xlu0 %166
    %v168 = vsel %vm113, %v99, 0.0
    %169 = vadd.xlane.f32.xlu0 %v168
    %v170 = vpop.xlane.xlu0 %169
    %v171 = vsel %vm113, %v100, 0.0
    %172 = vadd.xlane.f32.xlu0 %v171
    %v173 = vpop.xlane.xlu0 %172
    %v174 = vsel %vm113, %v101, 0.0
    %175 = vadd.xlane.f32.xlu0 %v174
    %v176 = vpop.xlane.xlu0 %175
    %v177 = vsel %vm113, %v102, 0.0
    %178 = vadd.xlane.f32.xlu0 %v177
    %v179 = vpop.xlane.xlu0 %178
    %v180 = vsel %vm113, %v103, 0.0
    %181 = vadd.xlane.f32.xlu0 %v180
    %v182 = vpop.xlane.xlu0 %181
    %v183 = vsel %vm113, %v104, 0.0
    %184 = vadd.xlane.f32.xlu0 %v183
    %v185 = vpop.xlane.xlu0 %184
    %v186 = vsel %vm113, %v105, 0.0
    %187 = vadd.xlane.f32.xlu0 %v186
    %v188 = vpop.xlane.xlu0 %187
    %v189 = vsel %vm113, %v106, 0.0
    %190 = vadd.xlane.f32.xlu0 %v189
    %v191 = vpop.xlane.xlu0 %190
    %v192 = vsel %vm113, %v107, 0.0
    %193 = vadd.xlane.f32.xlu0 %v192
    %v194 = vpop.xlane.xlu0 %193
    %v195 = vsel %vm113, %v108, 0.0
    %196 = vadd.xlane.f32.xlu0 %v195
    %v197 = vpop.xlane.xlu0 %196
    %v198 = vsel %vm113, %v109, 0.0
    %199 = vadd.xlane.f32.xlu0 %v198
    %v200 = vpop.xlane.xlu0 %199
    %v201 = vsel %vm113, %v110, 0.0
    %202 = vadd.xlane.f32.xlu0 %v201
    %v203 = vpop.xlane.xlu0 %202
    %v204 = vsel %vm113, %v111, 0.0
    %205 = vadd.xlane.f32.xlu0 %v204
    %v206 = vpop.xlane.xlu0 %205
    %v207 = vsel %vm113, %v112, 0.0
    %208 = vadd.xlane.f32.xlu0 %v207
    %v209 = vpop.xlane.xlu0 %208
    %v210 = vld [vmem:[%s2] sm:$0x1]
    %v212 = vperm.slane %v210, 0
    %v213 = vlaneseq
    %v214 = vshrl.u32 %v213, 7
    %216 = vset.pattern.permute.xlu0 %v214
    %217 = vperm.xlu0 %216, %v212
    %v218 = vpop.permute.xlu0 %217
    %v219 = vlaneseq
    %v220 = vshrl.u32 %v219, 7
    %v221 = vadd.s32 %v220, 8
    %222 = vset.pattern.permute.xlu0 %v221
    %223 = vperm.xlu0 %222, %v212
    %v224 = vpop.permute.xlu0 %223
    %v227 = vadd.f32 %v116, %v218
    %v228 = vadd.f32 %v119, %v224
    %v229 = vadd.f32 %v122, %v218
    %v230 = vadd.f32 %v125, %v224
    %v231 = vadd.f32 %v128, %v218
    %v232 = vadd.f32 %v131, %v224
    %v233 = vadd.f32 %v134, %v218
    %v234 = vadd.f32 %v137, %v224
    %v235 = vadd.f32 %v140, %v218
    %v236 = vadd.f32 %v143, %v224
    %v237 = vadd.f32 %v146, %v218
    %v238 = vadd.f32 %v149, %v224
    %v239 = vadd.f32 %v152, %v218
    %v240 = vadd.f32 %v155, %v224
    %v241 = vadd.f32 %v158, %v218
    %v242 = vadd.f32 %v161, %v224
    %v243 = vadd.f32 %v164, %v218
    %v244 = vadd.f32 %v167, %v224
    %v245 = vadd.f32 %v170, %v218
    %v246 = vadd.f32 %v173, %v224
    %v247 = vadd.f32 %v176, %v218
    %v248 = vadd.f32 %v179, %v224
    %v249 = vadd.f32 %v182, %v218
    %v250 = vadd.f32 %v185, %v224
    %v251 = vadd.f32 %v188, %v218
    %v252 = vadd.f32 %v191, %v224
    %v253 = vadd.f32 %v194, %v218
    %v254 = vadd.f32 %v197, %v224
    %v255 = vadd.f32 %v200, %v218
    %v256 = vadd.f32 %v203, %v224
    %v257 = vadd.f32 %v206, %v218
    %v258 = vadd.f32 %v209, %v224
    %291 = vset.pattern.permute.xlu0 0
    %292 = vperm.xlu0 %291, %v227
    %v293 = vpop.permute.xlu0 %292
    %294 = vset.pattern.permute.xlu0 0
    %295 = vperm.xlu0 %294, %v228
    %v296 = vpop.permute.xlu0 %295
    %297 = vset.pattern.permute.xlu0 0
    %298 = vperm.xlu0 %297, %v229
    %v299 = vpop.permute.xlu0 %298
    %300 = vset.pattern.permute.xlu0 0
    %301 = vperm.xlu0 %300, %v230
    %v302 = vpop.permute.xlu0 %301
    %303 = vset.pattern.permute.xlu0 0
    %304 = vperm.xlu0 %303, %v231
    %v305 = vpop.permute.xlu0 %304
    %306 = vset.pattern.permute.xlu0 0
    %307 = vperm.xlu0 %306, %v232
    %v308 = vpop.permute.xlu0 %307
    %309 = vset.pattern.permute.xlu0 0
    %310 = vperm.xlu0 %309, %v233
    %v311 = vpop.permute.xlu0 %310
    %312 = vset.pattern.permute.xlu0 0
    %313 = vperm.xlu0 %312, %v234
    %v314 = vpop.permute.xlu0 %313
    %315 = vset.pattern.permute.xlu0 0
    %316 = vperm.xlu0 %315, %v235
    %v317 = vpop.permute.xlu0 %316
    %318 = vset.pattern.permute.xlu0 0
    %319 = vperm.xlu0 %318, %v236
    %v320 = vpop.permute.xlu0 %319
    %321 = vset.pattern.permute.xlu0 0
    %322 = vperm.xlu0 %321, %v237
    %v323 = vpop.permute.xlu0 %322
    %324 = vset.pattern.permute.xlu0 0
    %325 = vperm.xlu0 %324, %v238
    %v326 = vpop.permute.xlu0 %325
    %327 = vset.pattern.permute.xlu0 0
    %328 = vperm.xlu0 %327, %v239
    %v329 = vpop.permute.xlu0 %328
    %330 = vset.pattern.permute.xlu0 0
    %331 = vperm.xlu0 %330, %v240
    %v332 = vpop.permute.xlu0 %331
    %333 = vset.pattern.permute.xlu0 0
    %334 = vperm.xlu0 %333, %v241
    %v335 = vpop.permute.xlu0 %334
    %336 = vset.pattern.permute.xlu0 0
    %337 = vperm.xlu0 %336, %v242
    %v338 = vpop.permute.xlu0 %337
    %339 = vset.pattern.permute.xlu0 0
    %340 = vperm.xlu0 %339, %v243
    %v341 = vpop.permute.xlu0 %340
    %342 = vset.pattern.permute.xlu0 0
    %343 = vperm.xlu0 %342, %v244
    %v344 = vpop.permute.xlu0 %343
    %345 = vset.pattern.permute.xlu0 0
    %346 = vperm.xlu0 %345, %v245
    %v347 = vpop.permute.xlu0 %346
    %348 = vset.pattern.permute.xlu0 0
    %349 = vperm.xlu0 %348, %v246
    %v350 = vpop.permute.xlu0 %349
    %351 = vset.pattern.permute.xlu0 0
    %352 = vperm.xlu0 %351, %v247
    %v353 = vpop.permute.xlu0 %352
    %354 = vset.pattern.permute.xlu0 0
    %355 = vperm.xlu0 %354, %v248
    %v356 = vpop.permute.xlu0 %355
    %357 = vset.pattern.permute.xlu0 0
    %358 = vperm.xlu0 %357, %v249
    %v359 = vpop.permute.xlu0 %358
    %360 = vset.pattern.permute.xlu0 0
    %361 = vperm.xlu0 %360, %v250
    %v362 = vpop.permute.xlu0 %361
    %363 = vset.pattern.permute.xlu0 0
    %364 = vperm.xlu0 %363, %v251
    %v365 = vpop.permute.xlu0 %364
    %366 = vset.pattern.permute.xlu0 0
    %367 = vperm.xlu0 %366, %v252
    %v368 = vpop.permute.xlu0 %367
    %369 = vset.pattern.permute.xlu0 0
    %370 = vperm.xlu0 %369, %v253
    %v371 = vpop.permute.xlu0 %370
    %372 = vset.pattern.permute.xlu0 0
    %373 = vperm.xlu0 %372, %v254
    %v374 = vpop.permute.xlu0 %373
    %375 = vset.pattern.permute.xlu0 0
    %376 = vperm.xlu0 %375, %v255
    %v377 = vpop.permute.xlu0 %376
    %378 = vset.pattern.permute.xlu0 0
    %379 = vperm.xlu0 %378, %v256
    %v380 = vpop.permute.xlu0 %379
    %381 = vset.pattern.permute.xlu0 0
    %382 = vperm.xlu0 %381, %v257
    %v383 = vpop.permute.xlu0 %382
    %384 = vset.pattern.permute.xlu0 0
    %385 = vperm.xlu0 %384, %v258
    %v386 = vpop.permute.xlu0 %385
    %v387 = vlaneseq
    %v388 = vand.u32 %v387, 127
    %v389 = vperm.slane %v293, %v388
    %v390 = vadd.s32 %v388, 4294967288
    %v391 = vperm.slane %v296, %v390
    %vm392 = vcmask 130112
    %v393 = vsel %vm392, %v391, %v389
    %v394 = vperm.slane %v299, %v388
    %v395 = vperm.slane %v302, %v390
    %v396 = vsel %vm392, %v395, %v394
    %v397 = vperm.slane %v305, %v388
    %v398 = vperm.slane %v308, %v390
    %v399 = vsel %vm392, %v398, %v397
    %v400 = vperm.slane %v311, %v388
    %v401 = vperm.slane %v314, %v390
    %v402 = vsel %vm392, %v401, %v400
    %v403 = vperm.slane %v317, %v388
    %v404 = vperm.slane %v320, %v390
    %v405 = vsel %vm392, %v404, %v403
    %v406 = vperm.slane %v323, %v388
    %v407 = vperm.slane %v326, %v390
    %v408 = vsel %vm392, %v407, %v406
    %v409 = vperm.slane %v329, %v388
    %v410 = vperm.slane %v332, %v390
    %v411 = vsel %vm392, %v410, %v409
    %v412 = vperm.slane %v335, %v388
    %v413 = vperm.slane %v338, %v390
    %v414 = vsel %vm392, %v413, %v412
    %v415 = vperm.slane %v341, %v388
    %v416 = vperm.slane %v344, %v390
    %v417 = vsel %vm392, %v416, %v415
    %v418 = vperm.slane %v347, %v388
    %v419 = vperm.slane %v350, %v390
    %v420 = vsel %vm392, %v419, %v418
    %v421 = vperm.slane %v353, %v388
    %v422 = vperm.slane %v356, %v390
    %v423 = vsel %vm392, %v422, %v421
    %v424 = vperm.slane %v359, %v388
    %v425 = vperm.slane %v362, %v390
    %v426 = vsel %vm392, %v425, %v424
    %v427 = vperm.slane %v365, %v388
    %v428 = vperm.slane %v368, %v390
    %v429 = vsel %vm392, %v428, %v427
    %v430 = vperm.slane %v371, %v388
    %v431 = vperm.slane %v374, %v390
    %v432 = vsel %vm392, %v431, %v430
    %v433 = vperm.slane %v377, %v388
    %v434 = vperm.slane %v380, %v390
    %v435 = vsel %vm392, %v434, %v433
    %v436 = vperm.slane %v383, %v388
    %v437 = vperm.slane %v386, %v390
    %v438 = vsel %vm392, %v437, %v436
    %vm439 = vcmask 1041409
    %v440 = vsel %vm439, %v396, %v393
    %vm441 = vcmask 1042434
    %v442 = vsel %vm441, %v399, %v440
    %vm443 = vcmask 1043459
    %v444 = vsel %vm443, %v402, %v442
    %vm445 = vcmask 1044484
    %v446 = vsel %vm445, %v405, %v444
    %vm447 = vcmask 1045509
    %v448 = vsel %vm447, %v408, %v446
    %vm449 = vcmask 1046534
    %v450 = vsel %vm449, %v411, %v448
    %vm451 = vcmask 1047559
    %v452 = vsel %vm451, %v414, %v450
    %v453 = vsel %vm439, %v420, %v417
    %v454 = vsel %vm441, %v423, %v453
    %v455 = vsel %vm443, %v426, %v454
    %v456 = vsel %vm445, %v429, %v455
    %v457 = vsel %vm447, %v432, %v456
    %v458 = vsel %vm449, %v435, %v457
    %v459 = vsel %vm451, %v438, %v458
    %vm462 = vcmask 130048
    %463 = vst.msk [vmem:[#allocation7] sm:$0xff] %vm462, %v452
    %464 = vst.msk [vmem:[#allocation7 + $0x8] sm:$0xff] %vm462, %v459
    // Predicated region
    $region22: #{tpu_custom_call.1} parent=1 // pred_check
      _
    $region23: #{tpu_custom_call.1} parent=1 // pred_check_branch
      %466 = sbr.rel (0) target = $region25
    $region24: #{tpu_custom_call.1} parent=1 // pred_region
      %468 = vsyncadd [#allocation4], 0
      %s469 = sshll.u32 [#allocation7], 4
      %s470 = int_to_ptr.vmem [resolvable:$true] %s469
      %s471 = sshll.u32 %s3, 4
      %s472 = int_to_ptr.hbm [resolvable:$true] %s471
      %477 = dma.vmem_to_hbm [thread:$0]  %s470, 256, %s472, [#allocation4], 128, 128, 8
    $region25: #{tpu_custom_call.1} parent=1 // pred_fallthru
      _
    // Predicated region
    $region26: #{tpu_custom_call.1} parent=1 // pred_check
      _
    $region27: #{tpu_custom_call.1} parent=1 // pred_check_branch
      %479 = sbr.rel (0) target = $region29
    $region28: #{tpu_custom_call.1} parent=1 // pred_region
      %481 = dma.done [#allocation4], 256
    $region29: #{tpu_custom_call.1} parent=1 // pred_fallthru
      _
    %482 = vsyncpa [#allocation3], 1
    %483 = vsyncpa [#allocation6], 1
    %484 = vsyncpa [#allocation4], 1

</llo_original>
